<compile_context>
chip_gen: v7x
topology: tpu7x:2x2x1
jax: 0.10.0
libtpu: 0.0.40
codegen_flags: <defaults>
</compile_context>

<pallas_src>
import functools

import jax
import jax.numpy as jnp
from jax.experimental import pallas as pl
from jax.experimental.pallas import tpu as pltpu

input_size = 28
hidden_size = 56
num_classes = 1


def mlp_kernel(x_ref, w1_ref, b1_ref, w2_ref, b2_ref, o_ref):
    # fc1 + tanh  (MXU matmul, f32 accumulate; tanh on the EUP).
    h = jnp.dot(x_ref[...], w1_ref[...], preferred_element_type=jnp.float32)
    h = jnp.tanh(h + b1_ref[...])                       # (TILE_B, hidden)

    # fc2 with num_classes == 1: elementwise multiply + lane reduction
    # (VPU + XLU) instead of a [TILE_B,56]@[56,1] MXU matmul.
    y = jnp.sum(h * w2_ref[...], axis=-1)               # (TILE_B,)
    y = y + b2_ref[0, 0]                                # scalar bias from SMEM

    # Lane-dense store: TILE_B results laid along the lane axis.
    o_ref[...] = jax.nn.sigmoid(y)[None, :].astype(o_ref.dtype)   # (1, TILE_B)


def _round_up(n, m):
    return ((n + m - 1) // m) * m


@functools.partial(jax.jit, static_argnames=("tile_b",))
def mlp_forward(x, w1, b1, w2, b2, *, tile_b=1024):
    assert w2.shape[1] == 1, "lane-reduction fc2 path assumes num_classes == 1"
    B, in_dim = x.shape
    hid = w1.shape[1]

    # Tile size: multiple of 128 (lane-dense output blocks), capped at 1024 rows.
    TILE_B = min(tile_b, _round_up(B, 128))
    Bp = _round_up(B, TILE_B)
    if Bp != B:
        x = jnp.pad(x, ((0, Bp - B), (0, 0)))
    num_tiles = Bp // TILE_B

    w2_row = w2.T.astype(jnp.float32)            # (1, hidden)
    b2_s = b2.reshape(1, 1).astype(jnp.float32)  # scalar, goes to SMEM

    cost = pl.CostEstimate(
        flops=2 * Bp * (in_dim * hid + hid),
        transcendentals=Bp * (hid + 1),
        bytes_accessed=Bp * (in_dim + 1) * 4 + (in_dim * hid + 2 * hid + 1) * 4,
    )

    out = pl.pallas_call(
        mlp_kernel,
        out_shape=jax.ShapeDtypeStruct((num_tiles, TILE_B), jnp.float32),
        grid=(num_tiles,),
        in_specs=[
            # x streams tile-by-tile (double-buffered by Pallas).
            pl.BlockSpec((TILE_B, in_dim), lambda i: (i, 0)),
            # Parameters: constant block index -> resident in VMEM across the grid.
            pl.BlockSpec((in_dim, hid), lambda i: (0, 0)),
            pl.BlockSpec((1, hid), lambda i: (0, 0)),
            pl.BlockSpec((1, hid), lambda i: (0, 0)),
            pl.BlockSpec((1, 1), lambda i: (0, 0),
                         memory_space=pltpu.MemorySpace.SMEM),
        ],
        out_specs=pl.BlockSpec((1, TILE_B), lambda i: (i, 0)),
        compiler_params=pltpu.CompilerParams(
            dimension_semantics=("parallel",),
        ),
        cost_estimate=cost,
    )(x, w1, b1, w2_row, b2_s)

    # (num_tiles, TILE_B) -> (B, num_classes)
    return out.reshape(Bp)[:B].reshape(B, 1)


def init_params(key):
    # Deterministic init mimicking nn.Linear default: U(-1/sqrt(fan_in), 1/sqrt(fan_in))
    k1, k2, k3, k4 = jax.random.split(key, 4)
    bound1 = 1.0 / jnp.sqrt(jnp.float32(input_size))
    bound2 = 1.0 / jnp.sqrt(jnp.float32(hidden_size))
    w1 = jax.random.uniform(k1, (input_size, hidden_size), jnp.float32, -bound1, bound1)
    b1 = jax.random.uniform(k2, (1, hidden_size), jnp.float32, -bound1, bound1)
    w2 = jax.random.uniform(k3, (hidden_size, num_classes), jnp.float32, -bound2, bound2)
    b2 = jax.random.uniform(k4, (1, num_classes), jnp.float32, -bound2, bound2)
    return w1, b1, w2, b2


if __name__ == "__main__":
    key = jax.random.PRNGKey(0)
    kx, kp = jax.random.split(key)
    B = 8
    x = jax.random.normal(kx, (B, input_size), jnp.float32)
    w1, b1, w2, b2 = init_params(kp)

    out = mlp_forward(x, w1, b1, w2, b2)
    out = jax.block_until_ready(out)

    # Pure-JAX reference check
    ref = jax.nn.sigmoid(jnp.tanh(x @ w1 + b1) @ w2 + b2)
    assert out.shape == (B, num_classes)
    assert jnp.allclose(out, ref, atol=1e-5, rtol=1e-5)
    print("KERNEL_OK")
</pallas_src>

<mosaic_0001>
module attributes {stable_mosaic.version = 11 : i64} {
  func.func @mlp_kernel(%arg0: i32, %arg1: memref<128x28xf32, #tpu.memory_space<vmem>>, %arg2: memref<28x56xf32, #tpu.memory_space<vmem>>, %arg3: memref<1x56xf32, #tpu.memory_space<vmem>>, %arg4: memref<1x56xf32, #tpu.memory_space<vmem>>, %arg5: memref<1x1xf32, #tpu.memory_space<smem>>, %arg6: memref<1x128xf32, #tpu.memory_space<vmem>>) attributes {dimension_semantics = [#tpu.dimension_semantics<parallel>], iteration_bounds = array<i64: 1>, scalar_prefetch = 0 : i64, scratch_operands = 0 : i64, tpu.core_type = #tpu.core_type<tc>, window_params = [{transform_indices = @transform_0, window_bounds = array<i64: 128, 28>}, {pipeline_mode = #tpu.pipeline_mode<synchronous>, transform_indices = @transform_1, window_bounds = array<i64: 28, 56>}, {pipeline_mode = #tpu.pipeline_mode<synchronous>, transform_indices = @transform_2, window_bounds = array<i64: 1, 56>}, {pipeline_mode = #tpu.pipeline_mode<synchronous>, transform_indices = @transform_3, window_bounds = array<i64: 1, 56>}, {transform_indices = @transform_4, window_bounds = array<i64: 1, 1>}, {transform_indices = @transform_5, window_bounds = array<i64: 1, 128>}]} {
    %c0 = arith.constant 0 : index
    %c0_0 = arith.constant 0 : index
    %0 = vector.load %arg1[%c0, %c0_0] : memref<128x28xf32, #tpu.memory_space<vmem>>, vector<128x28xf32>
    %c0_1 = arith.constant 0 : index
    %c0_2 = arith.constant 0 : index
    %1 = vector.load %arg2[%c0_1, %c0_2] : memref<28x56xf32, #tpu.memory_space<vmem>>, vector<28x56xf32>
    %cst = arith.constant dense<0.000000e+00> : vector<128x56xf32>
    %2 = tpu.matmul %0, %1, %cst {dimension_numbers = #tpu.dot_dimension_numbers<[1], [0], [0], [1], [0, 0, 1, 1], [], []>} : vector<128x28xf32>, vector<28x56xf32>, vector<128x56xf32> -> vector<128x56xf32>
    %c0_3 = arith.constant 0 : index
    %c0_4 = arith.constant 0 : index
    %3 = vector.load %arg3[%c0_3, %c0_4] : memref<1x56xf32, #tpu.memory_space<vmem>>, vector<1x56xf32>
    %4 = vector.broadcast %3 : vector<1x56xf32> to vector<128x56xf32>
    %5 = arith.addf %2, %4 : vector<128x56xf32>
    %6 = math.tanh %5 : vector<128x56xf32>
    %c0_5 = arith.constant 0 : index
    %c0_6 = arith.constant 0 : index
    %7 = vector.load %arg4[%c0_5, %c0_6] : memref<1x56xf32, #tpu.memory_space<vmem>>, vector<1x56xf32>
    %8 = vector.broadcast %7 : vector<1x56xf32> to vector<128x56xf32>
    %9 = arith.mulf %6, %8 : vector<128x56xf32>
    %cst_7 = arith.constant dense<0.000000e+00> : vector<128xf32>
    %10 = vector.multi_reduction <add>, %9, %cst_7 [1] : vector<128x56xf32> to vector<128xf32>
    %c0_8 = arith.constant 0 : index
    %c0_9 = arith.constant 0 : index
    %11 = memref.load %arg5[%c0_8, %c0_9] : memref<1x1xf32, #tpu.memory_space<smem>>
    %12 = vector.broadcast %11 : f32 to vector<128xf32>
    %13 = arith.addf %10, %12 : vector<128xf32>
    %14 = arith.negf %13 : vector<128xf32>
    %15 = math.exp %14 : vector<128xf32>
    %cst_10 = arith.constant 1.000000e+00 : f32
    %16 = vector.broadcast %cst_10 : f32 to vector<128xf32>
    %17 = arith.addf %16, %15 : vector<128xf32>
    %18 = arith.divf %16, %17 : vector<128xf32>
    %19 = vector.shape_cast %18 : vector<128xf32> to vector<1x128xf32>
    %c0_11 = arith.constant 0 : index
    %c0_12 = arith.constant 0 : index
    %20 = vector.load %arg6[%c0_11, %c0_12] : memref<1x128xf32, #tpu.memory_space<vmem>>, vector<1x128xf32>
    tpu.vector_store %arg6[%c0_11, %c0_12], %19 {strides = array<i32>} : memref<1x128xf32, #tpu.memory_space<vmem>>, vector<1x128xf32>,
    return
  }
  func.func @transform_0(%arg0: i32) -> (i32, i32) {
    %c0_i32 = arith.constant 0 : i32
    %c0_i32_0 = arith.constant 0 : i32
    return %arg0, %c0_i32 : i32, i32
  }
  func.func @transform_1(%arg0: i32) -> (i32, i32) {
    %c0_i32 = arith.constant 0 : i32
    %c0_i32_0 = arith.constant 0 : i32
    %c0_i32_1 = arith.constant 0 : i32
    return %c0_i32, %c0_i32_0 : i32, i32
  }
  func.func @transform_2(%arg0: i32) -> (i32, i32) {
    %c0_i32 = arith.constant 0 : i32
    %c0_i32_0 = arith.constant 0 : i32
    %c0_i32_1 = arith.constant 0 : i32
    return %c0_i32, %c0_i32_0 : i32, i32
  }
  func.func @transform_3(%arg0: i32) -> (i32, i32) {
    %c0_i32 = arith.constant 0 : i32
    %c0_i32_0 = arith.constant 0 : i32
    %c0_i32_1 = arith.constant 0 : i32
    return %c0_i32, %c0_i32_0 : i32, i32
  }
  func.func @transform_4(%arg0: i32) -> (i32, i32) {
    %c0_i32 = arith.constant 0 : i32
    %c0_i32_0 = arith.constant 0 : i32
    %c0_i32_1 = arith.constant 0 : i32
    return %c0_i32, %c0_i32_0 : i32, i32
  }
  func.func @transform_5(%arg0: i32) -> (i32, i32) {
    %c0_i32 = arith.constant 0 : i32
    %c0_i32_0 = arith.constant 0 : i32
    return %arg0, %c0_i32 : i32, i32
  }
}

</mosaic_0001>

<llo_original>
// kernel: mlp_forward.1
$region0: #{mlp_forward.1}
  #allocation0 [shape = 'u32[]', space=smem, size = 0x4, offset = 0x4, fixed_abs, tag = 'smem constant byte address 0x4 - core index']
  #allocation1 [shape = 'u32[144,128]{1,0:T(1,128)}', space=vmem, size = 0x12000, scoped, tag = 'internal scratch']
  #allocation2 [shape = 'f32[1,1]{1,0:T(1,128)S(6)}', space=smem, size = 0x200, scoped, tag = 'scoped memory for mlp_forward.1']
  %s0 = inlined_call_operand.vmem [shape: f32[128,28], index: 0, kind: input, shape index: {}]
  %s1 = inlined_call_operand.vmem [shape: f32[28,56], index: 1, kind: input, shape index: {}]
  %s2 = inlined_call_operand.vmem [shape: f32[1,56], index: 2, kind: input, shape index: {}]
  %s3 = inlined_call_operand.vmem [shape: f32[1,56], index: 3, kind: input, shape index: {}]
  %s4 = inlined_call_operand.<no memory space> [shape: f32[1,1], index: 4, kind: input, shape index: {}]
  %s5 = inlined_call_operand.vmem [shape: f32[1,128], index: 5, kind: output, shape index: {}]
  %s6 = sld [smem:[#allocation0]]
  $region30: #{mlp_forward.1} parent=0
    _
  %s8 = ssub.s32 1, %s6
  %s9 = scalar_select 0, %s8, %s6
  %10 = sst [smem:[#allocation2]] %s4
  // Predicated region
  $region2: #{mlp_forward.1} parent=0 // pred_check
    _
  $region3: #{mlp_forward.1} parent=0 // pred_check_branch
    %12 = sbr.rel (0) target = $region5
  $region4: #{mlp_forward.1} parent=0 // pred_region
    _
  $region5: #{mlp_forward.1} parent=0 // pred_fallthru
    _
  // Predicated region
  $region6: #{mlp_forward.1} parent=0 // pred_check
    _
  $region7: #{mlp_forward.1} parent=0 // pred_check_branch
    %14 = sbr.rel (0) target = $region9
  $region8: #{mlp_forward.1} parent=0 // pred_region
    _
  $region9: #{mlp_forward.1} parent=0 // pred_fallthru
    _
  // Predicated region
  $region10: #{mlp_forward.1} parent=0 // pred_check
    _
  $region11: #{mlp_forward.1} parent=0 // pred_check_branch
    %16 = sbr.rel (0) target = $region13
  $region12: #{mlp_forward.1} parent=0 // pred_region
    _
  $region13: #{mlp_forward.1} parent=0 // pred_fallthru
    _
  // Predicated region
  $region14: #{mlp_forward.1} parent=0 // pred_check
    _
  $region15: #{mlp_forward.1} parent=0 // pred_check_branch
    %18 = sbr.rel (0) target = $region17
  $region16: #{mlp_forward.1} parent=0 // pred_region
    _
  $region17: #{mlp_forward.1} parent=0 // pred_fallthru
    _
  // Predicated region
  $region18: #{mlp_forward.1} parent=0 // pred_check
    _
  $region19: #{mlp_forward.1} parent=0 // pred_check_branch
    %20 = sbr.rel (0) target = $region21
  $region20: #{mlp_forward.1} parent=0 // pred_region
    _
  $region21: #{mlp_forward.1} parent=0 // pred_fallthru
    _
  %v21 = vld [vmem:[%s0] sm:$0xff]
  %v22 = vld [vmem:[%s0 + $0x8] sm:$0xff]
  %v23 = vld [vmem:[%s0 + $0x10] sm:$0xff]
  %v24 = vld [vmem:[%s0 + $0x18] sm:$0xff]
  %v25 = vld [vmem:[%s0 + $0x20] sm:$0xff]
  %v26 = vld [vmem:[%s0 + $0x28] sm:$0xff]
  %v27 = vld [vmem:[%s0 + $0x30] sm:$0xff]
  %v28 = vld [vmem:[%s0 + $0x38] sm:$0xff]
  %v29 = vld [vmem:[%s0 + $0x40] sm:$0xff]
  %v30 = vld [vmem:[%s0 + $0x48] sm:$0xff]
  %v31 = vld [vmem:[%s0 + $0x50] sm:$0xff]
  %v32 = vld [vmem:[%s0 + $0x58] sm:$0xff]
  %v33 = vld [vmem:[%s0 + $0x60] sm:$0xff]
  %v34 = vld [vmem:[%s0 + $0x68] sm:$0xff]
  %v35 = vld [vmem:[%s0 + $0x70] sm:$0xff]
  %v36 = vld [vmem:[%s0 + $0x78] sm:$0xff]
  %v37 = vld [vmem:[%s1] sm:$0xff]
  %v38 = vld [vmem:[%s1 + $0x8] sm:$0xff]
  %v39 = vld [vmem:[%s1 + $0x10] sm:$0xff]
  %v40 = vld [vmem:[%s1 + $0x18] sm:$0xf]
  %v41 = vld [vmem:[%s2] sm:$0x1]
  %v43 = vlaneseq
  %v44 = vshrl.u32 %v43, 7
  %v45 = vsub.s32 0, %v44
  %v46 = vrot.slane %v41, %v45
  %vm48 = vcmask 228352
  %v50 = vsel %vm48, %v21, 0
  %v53 = vsel %vm48, %v22, 0
  %v56 = vsel %vm48, %v23, 0
  %v59 = vsel %vm48, %v24, 0
  %v62 = vsel %vm48, %v25, 0
  %v65 = vsel %vm48, %v26, 0
  %v68 = vsel %vm48, %v27, 0
  %v71 = vsel %vm48, %v28, 0
  %v74 = vsel %vm48, %v29, 0
  %v77 = vsel %vm48, %v30, 0
  %v80 = vsel %vm48, %v31, 0
  %v83 = vsel %vm48, %v32, 0
  %v86 = vsel %vm48, %v33, 0
  %v89 = vsel %vm48, %v34, 0
  %v92 = vsel %vm48, %v35, 0
  %v95 = vsel %vm48, %v36, 0
  %vm97 = vcmask 1043456
  %v99 = vsel %vm97, %v40, 0
  %101 = vmatprep.subr.mxu0 0.0
  %102 = vmatpush1.msra.mxu0 %v37
  %103 = vmatprep.subr.mxu0 0.0
  %104 = vmatpush1.msra.mxu0 %v38
  %105 = vmatprep.subr.mxu0 0.0
  %106 = vmatpush1.msra.mxu0 %v39
  %107 = vmatprep.subr.mxu0 0.0
  %108 = vmatpush1.msra.mxu0 %v99
  %109 = vmatprep.subr.mxu0 0.0
  %110 = vmatpush1.msra.mxu0 0.0
  %111 = vmatprep.subr.mxu0 0.0
  %112 = vmatpush1.msra.mxu0 0.0
  %113 = vmatprep.subr.mxu0 0.0
  %114 = vmatpush1.msra.mxu0 0.0
  %115 = vmatprep.subr.mxu0 0.0
  %116 = vmatpush1.msra.mxu0 0.0
  %117 = vmatprep.subr.mxu0 0.0
  %118 = vmatpush1.msra.mxu0 0.0
  %119 = vmatprep.subr.mxu0 0.0
  %120 = vmatpush1.msra.mxu0 0.0
  %121 = vmatprep.subr.mxu0 0.0
  %122 = vmatpush1.msra.mxu0 0.0
  %123 = vmatprep.subr.mxu0 0.0
  %124 = vmatpush1.msra.mxu0 0.0
  %125 = vmatprep.subr.mxu0 0.0
  %126 = vmatpush1.msra.mxu0 0.0
  %127 = vmatprep.subr.mxu0 0.0
  %128 = vmatpush1.msra.mxu0 0.0
  %129 = vmatprep.subr.mxu0 0.0
  %130 = vmatpush1.msra.mxu0 0.0
  %131 = vmatprep.subr.mxu0 0.0
  %132 = vmatpush1.msra.mxu0 0.0
  %133 = vmatprep.subr.mxu0 0.0
  %134 = vmatpush1.msra.mxu0 0.0
  %135 = vmatprep.subr.mxu0 0.0
  %136 = vmatpush1.msra.mxu0 0.0
  %137 = vmatprep.subr.mxu0 0.0
  %138 = vmatpush1.msra.mxu0 0.0
  %139 = vmatprep.subr.mxu0 0.0
  %140 = vmatpush1.msra.mxu0 0.0
  %141 = vmatprep.subr.mxu0 0.0
  %142 = vmatpush1.msra.mxu0 0.0
  %143 = vmatprep.subr.mxu0 0.0
  %144 = vmatpush1.msra.mxu0 0.0
  %145 = vmatprep.subr.mxu0 0.0
  %146 = vmatpush1.msra.mxu0 0.0
  %147 = vmatprep.subr.mxu0 0.0
  %148 = vmatpush1.msra.mxu0 0.0
  %149 = vmatprep.subr.mxu0 0.0
  %150 = vmatpush1.msra.mxu0 0.0
  %151 = vmatprep.subr.mxu0 0.0
  %152 = vmatpush1.msra.mxu0 0.0
  %153 = vmatprep.subr.mxu0 0.0
  %154 = vmatpush1.msra.mxu0 0.0
  %155 = vmatprep.subr.mxu0 0.0
  %156 = vmatpush1.msra.mxu0 0.0
  %157 = vmatprep.subr.mxu0 0.0
  %158 = vmatpush1.msra.mxu0 0.0
  %159 = vmatprep.subr.mxu0 0.0
  %160 = vmatpush1.msra.mxu0 0.0
  %161 = vmatprep.subr.mxu0 0.0
  %162 = vmatpush1.msra.mxu0 0.0
  %163 = vmatprep.subr.mxu0 0.0
  %164 = vmatpush1.msra.mxu0 0.0
  %165 = vmatprep.mubr.f32.mxu0 0.0
  %166 = vmatmul.mubr.f32.gmra.mrb[0].mxu0 %v50
  %v167 = vpop.f32.mrb[0].mxu0
  %v168 = vadd.f32 %v46, %v167
  %v169 = vpop.f32.mrb[0].mxu0
  %170 = vmatprep.mubr.f32.mxu0 0.0
  %171 = vmatmul.mubr.f32.gmra.mrb[0].mxu0 %v53
  %v172 = vpop.f32.mrb[0].mxu0
  %v173 = vadd.f32 %v46, %v172
  %v174 = vpop.f32.mrb[0].mxu0
  %175 = vmatprep.mubr.f32.mxu0 0.0
  %176 = vmatmul.mubr.f32.gmra.mrb[0].mxu0 %v56
  %v177 = vpop.f32.mrb[0].mxu0
  %v178 = vadd.f32 %v46, %v177
  %v179 = vpop.f32.mrb[0].mxu0
  %180 = vmatprep.mubr.f32.mxu0 0.0
  %181 = vmatmul.mubr.f32.gmra.mrb[0].mxu0 %v59
  %v182 = vpop.f32.mrb[0].mxu0
  %v183 = vadd.f32 %v46, %v182
  %v184 = vpop.f32.mrb[0].mxu0
  %185 = vmatprep.mubr.f32.mxu0 0.0
  %186 = vmatmul.mubr.f32.gmra.mrb[0].mxu0 %v62
  %v187 = vpop.f32.mrb[0].mxu0
  %v188 = vadd.f32 %v46, %v187
  %v189 = vpop.f32.mrb[0].mxu0
  %190 = vmatprep.mubr.f32.mxu0 0.0
  %191 = vmatmul.mubr.f32.gmra.mrb[0].mxu0 %v65
  %v192 = vpop.f32.mrb[0].mxu0
  %v193 = vadd.f32 %v46, %v192
  %v194 = vpop.f32.mrb[0].mxu0
  %195 = vmatprep.mubr.f32.mxu0 0.0
  %196 = vmatmul.mubr.f32.gmra.mrb[0].mxu0 %v68
  %v197 = vpop.f32.mrb[0].mxu0
  %v198 = vadd.f32 %v46, %v197
  %v199 = vpop.f32.mrb[0].mxu0
  %200 = vmatprep.mubr.f32.mxu0 0.0
  %201 = vmatmul.mubr.f32.gmra.mrb[0].mxu0 %v71
  %v202 = vpop.f32.mrb[0].mxu0
  %v203 = vadd.f32 %v46, %v202
  %v204 = vpop.f32.mrb[0].mxu0
  %205 = vmatprep.mubr.f32.mxu0 0.0
  %206 = vmatmul.mubr.f32.gmra.mrb[0].mxu0 %v74
  %v207 = vpop.f32.mrb[0].mxu0
  %v208 = vadd.f32 %v46, %v207
  %v209 = vpop.f32.mrb[0].mxu0
  %210 = vmatprep.mubr.f32.mxu0 0.0
  %211 = vmatmul.mubr.f32.gmra.mrb[0].mxu0 %v77
  %v212 = vpop.f32.mrb[0].mxu0
  %v213 = vadd.f32 %v46, %v212
  %v214 = vpop.f32.mrb[0].mxu0
  %215 = vmatprep.mubr.f32.mxu0 0.0
  %216 = vmatmul.mubr.f32.gmra.mrb[0].mxu0 %v80
  %v217 = vpop.f32.mrb[0].mxu0
  %v218 = vadd.f32 %v46, %v217
  %v219 = vpop.f32.mrb[0].mxu0
  %220 = vmatprep.mubr.f32.mxu0 0.0
  %221 = vmatmul.mubr.f32.gmra.mrb[0].mxu0 %v83
  %v222 = vpop.f32.mrb[0].mxu0
  %v223 = vadd.f32 %v46, %v222
  %v224 = vpop.f32.mrb[0].mxu0
  %225 = vmatprep.mubr.f32.mxu0 0.0
  %226 = vmatmul.mubr.f32.gmra.mrb[0].mxu0 %v86
  %v227 = vpop.f32.mrb[0].mxu0
  %v228 = vadd.f32 %v46, %v227
  %v229 = vpop.f32.mrb[0].mxu0
  %230 = vmatprep.mubr.f32.mxu0 0.0
  %231 = vmatmul.mubr.f32.gmra.mrb[0].mxu0 %v89
  %v232 = vpop.f32.mrb[0].mxu0
  %v233 = vadd.f32 %v46, %v232
  %v234 = vpop.f32.mrb[0].mxu0
  %235 = vmatprep.mubr.f32.mxu0 0.0
  %236 = vmatmul.mubr.f32.gmra.mrb[0].mxu0 %v92
  %v237 = vpop.f32.mrb[0].mxu0
  %v238 = vadd.f32 %v46, %v237
  %v239 = vpop.f32.mrb[0].mxu0
  %240 = vmatprep.mubr.f32.mxu0 0.0
  %241 = vmatmul.mubr.f32.gmra.mrb[0].mxu0 %v95
  %v242 = vpop.f32.mrb[0].mxu0
  %v243 = vadd.f32 %v46, %v242
  %v244 = vpop.f32.mrb[0].mxu0
  %245 = vdwg.mxu0
  %v246 = vtanh.pop %v168
  %v247 = vtanh.pop %v173
  %v248 = vtanh.pop %v178
  %v249 = vtanh.pop %v183
  %v250 = vtanh.pop %v188
  %v251 = vtanh.pop %v193
  %v252 = vtanh.pop %v198
  %v253 = vtanh.pop %v203
  %v254 = vtanh.pop %v208
  %v255 = vtanh.pop %v213
  %v256 = vtanh.pop %v218
  %v257 = vtanh.pop %v223
  %v258 = vtanh.pop %v228
  %v259 = vtanh.pop %v233
  %v260 = vtanh.pop %v238
  %v261 = vtanh.pop %v243
  %v262 = vld [vmem:[%s3] sm:$0x1]
  %v264 = vlaneseq
  %v265 = vshrl.u32 %v264, 7
  %v266 = vsub.s32 0, %v265
  %v267 = vrot.slane %v262, %v266
  %v269 = vmul.f32 %v246, %v267
  %v270 = vmul.f32 %v247, %v267
  %v271 = vmul.f32 %v248, %v267
  %v272 = vmul.f32 %v249, %v267
  %v273 = vmul.f32 %v250, %v267
  %v274 = vmul.f32 %v251, %v267
  %v275 = vmul.f32 %v252, %v267
  %v276 = vmul.f32 %v253, %v267
  %v277 = vmul.f32 %v254, %v267
  %v278 = vmul.f32 %v255, %v267
  %v279 = vmul.f32 %v256, %v267
  %v280 = vmul.f32 %v257, %v267
  %v281 = vmul.f32 %v258, %v267
  %v282 = vmul.f32 %v259, %v267
  %v283 = vmul.f32 %v260, %v267
  %v284 = vmul.f32 %v261, %v267
  %vm285 = vcmask 457728
  %v286 = vsel %vm285, %v269, 0.0
  %287 = vadd.xlane.f32.xlu0 %v286
  %v288 = vpop.xlane.xlu0 %287
  %v289 = vsel %vm285, %v270, 0.0
  %290 = vadd.xlane.f32.xlu0 %v289
  %v291 = vpop.xlane.xlu0 %290
  %v292 = vsel %vm285, %v271, 0.0
  %293 = vadd.xlane.f32.xlu0 %v292
  %v294 = vpop.xlane.xlu0 %293
  %v295 = vsel %vm285, %v272, 0.0
  %296 = vadd.xlane.f32.xlu0 %v295
  %v297 = vpop.xlane.xlu0 %296
  %v298 = vsel %vm285, %v273, 0.0
  %299 = vadd.xlane.f32.xlu0 %v298
  %v300 = vpop.xlane.xlu0 %299
  %v301 = vsel %vm285, %v274, 0.0
  %302 = vadd.xlane.f32.xlu0 %v301
  %v303 = vpop.xlane.xlu0 %302
  %v304 = vsel %vm285, %v275, 0.0
  %305 = vadd.xlane.f32.xlu0 %v304
  %v306 = vpop.xlane.xlu0 %305
  %v307 = vsel %vm285, %v276, 0.0
  %308 = vadd.xlane.f32.xlu0 %v307
  %v309 = vpop.xlane.xlu0 %308
  %v310 = vsel %vm285, %v277, 0.0
  %311 = vadd.xlane.f32.xlu0 %v310
  %v312 = vpop.xlane.xlu0 %311
  %v313 = vsel %vm285, %v278, 0.0
  %314 = vadd.xlane.f32.xlu0 %v313
  %v315 = vpop.xlane.xlu0 %314
  %v316 = vsel %vm285, %v279, 0.0
  %317 = vadd.xlane.f32.xlu0 %v316
  %v318 = vpop.xlane.xlu0 %317
  %v319 = vsel %vm285, %v280, 0.0
  %320 = vadd.xlane.f32.xlu0 %v319
  %v321 = vpop.xlane.xlu0 %320
  %v322 = vsel %vm285, %v281, 0.0
  %323 = vadd.xlane.f32.xlu0 %v322
  %v324 = vpop.xlane.xlu0 %323
  %v325 = vsel %vm285, %v282, 0.0
  %326 = vadd.xlane.f32.xlu0 %v325
  %v327 = vpop.xlane.xlu0 %326
  %v328 = vsel %vm285, %v283, 0.0
  %329 = vadd.xlane.f32.xlu0 %v328
  %v330 = vpop.xlane.xlu0 %329
  %v331 = vsel %vm285, %v284, 0.0
  %332 = vadd.xlane.f32.xlu0 %v331
  %v333 = vpop.xlane.xlu0 %332
  %s334 = sld [smem:[#allocation2]]
  %v335 = vstv %s334
  %v336 = vadd.f32 %v288, %v335
  %v337 = vadd.f32 %v291, %v335
  %v338 = vadd.f32 %v294, %v335
  %v339 = vadd.f32 %v297, %v335
  %v340 = vadd.f32 %v300, %v335
  %v341 = vadd.f32 %v303, %v335
  %v342 = vadd.f32 %v306, %v335
  %v343 = vadd.f32 %v309, %v335
  %v344 = vadd.f32 %v312, %v335
  %v345 = vadd.f32 %v315, %v335
  %v346 = vadd.f32 %v318, %v335
  %v347 = vadd.f32 %v321, %v335
  %v348 = vadd.f32 %v324, %v335
  %v349 = vadd.f32 %v327, %v335
  %v350 = vadd.f32 %v330, %v335
  %v351 = vadd.f32 %v333, %v335
  %v352 = vxor.u32 %v336, 2147483648
  %v353 = vxor.u32 %v337, 2147483648
  %v354 = vxor.u32 %v338, 2147483648
  %v355 = vxor.u32 %v339, 2147483648
  %v356 = vxor.u32 %v340, 2147483648
  %v357 = vxor.u32 %v341, 2147483648
  %v358 = vxor.u32 %v342, 2147483648
  %v359 = vxor.u32 %v343, 2147483648
  %v360 = vxor.u32 %v344, 2147483648
  %v361 = vxor.u32 %v345, 2147483648
  %v362 = vxor.u32 %v346, 2147483648
  %v363 = vxor.u32 %v347, 2147483648
  %v364 = vxor.u32 %v348, 2147483648
  %v365 = vxor.u32 %v349, 2147483648
  %v366 = vxor.u32 %v350, 2147483648
  %v367 = vxor.u32 %v351, 2147483648
  %v368 = vmul.f32 %v352, 1.442695
  %v369 = vpow.pop %v368
  %v370 = vmul.f32 %v353, 1.442695
  %v371 = vpow.pop %v370
  %v372 = vmul.f32 %v354, 1.442695
  %v373 = vpow.pop %v372
  %v374 = vmul.f32 %v355, 1.442695
  %v375 = vpow.pop %v374
  %v376 = vmul.f32 %v356, 1.442695
  %v377 = vpow.pop %v376
  %v378 = vmul.f32 %v357, 1.442695
  %v379 = vpow.pop %v378
  %v380 = vmul.f32 %v358, 1.442695
  %v381 = vpow.pop %v380
  %v382 = vmul.f32 %v359, 1.442695
  %v383 = vpow.pop %v382
  %v384 = vmul.f32 %v360, 1.442695
  %v385 = vpow.pop %v384
  %v386 = vmul.f32 %v361, 1.442695
  %v387 = vpow.pop %v386
  %v388 = vmul.f32 %v362, 1.442695
  %v389 = vpow.pop %v388
  %v390 = vmul.f32 %v363, 1.442695
  %v391 = vpow.pop %v390
  %v392 = vmul.f32 %v364, 1.442695
  %v393 = vpow.pop %v392
  %v394 = vmul.f32 %v365, 1.442695
  %v395 = vpow.pop %v394
  %v396 = vmul.f32 %v366, 1.442695
  %v397 = vpow.pop %v396
  %v398 = vmul.f32 %v367, 1.442695
  %v399 = vpow.pop %v398
  %v400 = vadd.f32 %v369, 1.0
  %v401 = vadd.f32 %v371, 1.0
  %v402 = vadd.f32 %v373, 1.0
  %v403 = vadd.f32 %v375, 1.0
  %v404 = vadd.f32 %v377, 1.0
  %v405 = vadd.f32 %v379, 1.0
  %v406 = vadd.f32 %v381, 1.0
  %v407 = vadd.f32 %v383, 1.0
  %v408 = vadd.f32 %v385, 1.0
  %v409 = vadd.f32 %v387, 1.0
  %v410 = vadd.f32 %v389, 1.0
  %v411 = vadd.f32 %v391, 1.0
  %v412 = vadd.f32 %v393, 1.0
  %v413 = vadd.f32 %v395, 1.0
  %v414 = vadd.f32 %v397, 1.0
  %v415 = vadd.f32 %v399, 1.0
  %v416 = vrcp.pop %v400
  %v417 = vmul.f32 1.0, %v416
  %v418 = vrcp.pop %v401
  %v419 = vmul.f32 1.0, %v418
  %v420 = vrcp.pop %v402
  %v421 = vmul.f32 1.0, %v420
  %v422 = vrcp.pop %v403
  %v423 = vmul.f32 1.0, %v422
  %v424 = vrcp.pop %v404
  %v425 = vmul.f32 1.0, %v424
  %v426 = vrcp.pop %v405
  %v427 = vmul.f32 1.0, %v426
  %v428 = vrcp.pop %v406
  %v429 = vmul.f32 1.0, %v428
  %v430 = vrcp.pop %v407
  %v431 = vmul.f32 1.0, %v430
  %v432 = vrcp.pop %v408
  %v433 = vmul.f32 1.0, %v432
  %v434 = vrcp.pop %v409
  %v435 = vmul.f32 1.0, %v434
  %v436 = vrcp.pop %v410
  %v437 = vmul.f32 1.0, %v436
  %v438 = vrcp.pop %v411
  %v439 = vmul.f32 1.0, %v438
  %v440 = vrcp.pop %v412
  %v441 = vmul.f32 1.0, %v440
  %v442 = vrcp.pop %v413
  %v443 = vmul.f32 1.0, %v442
  %v444 = vrcp.pop %v414
  %v445 = vmul.f32 1.0, %v444
  %v446 = vrcp.pop %v415
  %v447 = vmul.f32 1.0, %v446
  %v464 = vlaneseq
  %v465 = vand.u32 %v464, 127
  %v466 = vlaneseq
  %v467 = vshrl.u32 %v466, 7
  %v468 = vsub.s32 %v465, %v467
  %v469 = vrot.slane %v417, %v468
  %v470 = vadd.s32 %v465, 4294967288
  %v471 = vlaneseq
  %v472 = vshrl.u32 %v471, 7
  %v473 = vsub.s32 %v470, %v472
  %v474 = vrot.slane %v419, %v473
  %vm475 = vcmask 130112
  %v476 = vsel %vm475, %v474, %v469
  %v477 = vadd.s32 %v465, 4294967280
  %v478 = vlaneseq
  %v479 = vshrl.u32 %v478, 7
  %v480 = vsub.s32 %v477, %v479
  %v481 = vrot.slane %v421, %v480
  %vm482 = vcmask 195712
  %v483 = vsel %vm482, %v481, %v476
  %v484 = vadd.s32 %v465, 4294967272
  %v485 = vlaneseq
  %v486 = vshrl.u32 %v485, 7
  %v487 = vsub.s32 %v484, %v486
  %v488 = vrot.slane %v423, %v487
  %vm489 = vcmask 261312
  %v490 = vsel %vm489, %v488, %v483
  %v491 = vadd.s32 %v465, 4294967264
  %v492 = vlaneseq
  %v493 = vshrl.u32 %v492, 7
  %v494 = vsub.s32 %v491, %v493
  %v495 = vrot.slane %v425, %v494
  %vm496 = vcmask 326912
  %v497 = vsel %vm496, %v495, %v490
  %v498 = vadd.s32 %v465, 4294967256
  %v499 = vlaneseq
  %v500 = vshrl.u32 %v499, 7
  %v501 = vsub.s32 %v498, %v500
  %v502 = vrot.slane %v427, %v501
  %vm503 = vcmask 392512
  %v504 = vsel %vm503, %v502, %v497
  %v505 = vadd.s32 %v465, 4294967248
  %v506 = vlaneseq
  %v507 = vshrl.u32 %v506, 7
  %v508 = vsub.s32 %v505, %v507
  %v509 = vrot.slane %v429, %v508
  %vm510 = vcmask 458112
  %v511 = vsel %vm510, %v509, %v504
  %v512 = vadd.s32 %v465, 4294967240
  %v513 = vlaneseq
  %v514 = vshrl.u32 %v513, 7
  %v515 = vsub.s32 %v512, %v514
  %v516 = vrot.slane %v431, %v515
  %vm517 = vcmask 523712
  %v518 = vsel %vm517, %v516, %v511
  %v519 = vadd.s32 %v465, 4294967232
  %v520 = vlaneseq
  %v521 = vshrl.u32 %v520, 7
  %v522 = vsub.s32 %v519, %v521
  %v523 = vrot.slane %v433, %v522
  %vm524 = vcmask 589312
  %v525 = vsel %vm524, %v523, %v518
  %v526 = vadd.s32 %v465, 4294967224
  %v527 = vlaneseq
  %v528 = vshrl.u32 %v527, 7
  %v529 = vsub.s32 %v526, %v528
  %v530 = vrot.slane %v435, %v529
  %vm531 = vcmask 654912
  %v532 = vsel %vm531, %v530, %v525
  %v533 = vadd.s32 %v465, 4294967216
  %v534 = vlaneseq
  %v535 = vshrl.u32 %v534, 7
  %v536 = vsub.s32 %v533, %v535
  %v537 = vrot.slane %v437, %v536
  %vm538 = vcmask 720512
  %v539 = vsel %vm538, %v537, %v532
  %v540 = vadd.s32 %v465, 4294967208
  %v541 = vlaneseq
  %v542 = vshrl.u32 %v541, 7
  %v543 = vsub.s32 %v540, %v542
  %v544 = vrot.slane %v439, %v543
  %vm545 = vcmask 786112
  %v546 = vsel %vm545, %v544, %v539
  %v547 = vadd.s32 %v465, 4294967200
  %v548 = vlaneseq
  %v549 = vshrl.u32 %v548, 7
  %v550 = vsub.s32 %v547, %v549
  %v551 = vrot.slane %v441, %v550
  %vm552 = vcmask 851712
  %v553 = vsel %vm552, %v551, %v546
  %v554 = vadd.s32 %v465, 4294967192
  %v555 = vlaneseq
  %v556 = vshrl.u32 %v555, 7
  %v557 = vsub.s32 %v554, %v556
  %v558 = vrot.slane %v443, %v557
  %vm559 = vcmask 917312
  %v560 = vsel %vm559, %v558, %v553
  %v561 = vadd.s32 %v465, 4294967184
  %v562 = vlaneseq
  %v563 = vshrl.u32 %v562, 7
  %v564 = vsub.s32 %v561, %v563
  %v565 = vrot.slane %v445, %v564
  %vm566 = vcmask 982912
  %v567 = vsel %vm566, %v565, %v560
  %v568 = vadd.s32 %v465, 4294967176
  %v569 = vlaneseq
  %v570 = vshrl.u32 %v569, 7
  %v571 = vsub.s32 %v568, %v570
  %v572 = vrot.slane %v447, %v571
  %vm573 = vcmask 1048512
  %v574 = vsel %vm573, %v572, %v567
  %576 = vst [vmem:[%s5] sm:$0x1] %v574
  // Predicated region
  $region22: #{mlp_forward.1} parent=0 // pred_check
    _
  $region23: #{mlp_forward.1} parent=0 // pred_check_branch
    %578 = sbr.rel (0) target = $region25
  $region24: #{mlp_forward.1} parent=0 // pred_region
    _
  $region25: #{mlp_forward.1} parent=0 // pred_fallthru
    _
  // Predicated region
  $region26: #{mlp_forward.1} parent=0 // pred_check
    _
  $region27: #{mlp_forward.1} parent=0 // pred_check_branch
    %580 = sbr.rel (0) target = $region29
  $region28: #{mlp_forward.1} parent=0 // pred_region
    _
  $region29: #{mlp_forward.1} parent=0 // pred_fallthru
    _

</llo_original>
